<compile_context>
chip_gen: v7x
topology: tpu7x:2x2x1
jax: 0.10.0
libtpu: 0.0.40
codegen_flags: <defaults>
</compile_context>

<pallas_src>
import functools

import jax
import jax.numpy as jnp
from jax.experimental import pallas as pl
from jax.experimental.pallas import tpu as pltpu


def _vmem_capacity_bytes():
    """Queried per-core VMEM capacity; conservative 64 MiB fallback (v7x)."""
    try:
        return int(pltpu.get_tpu_info().vmem_capacity_bytes)
    except Exception:
        return 64 * 1024 * 1024


def _plan_tiling(n, c, x_itemsize, t_itemsize):
    """Dtype-aware row-tile size + scoped-VMEM limit.

    Accounts for lane padding of the class axis, double-buffered native-dtype
    input tiles and ~4 f32 tile-sized temporaries created by the body, so the
    estimate is conservative on every TPU generation (incl. v7x 64 MiB/TC)."""
    cap = _vmem_capacity_bytes()
    vmem_limit = (cap // 4) * 3                 # 96 MiB on 128 MiB parts, 48 MiB on v7x
    c_pad = ((c + 127) // 128) * 128
    row_bytes = c_pad * (2 * x_itemsize + 2 * t_itemsize + 4 * 4)
    budget = (vmem_limit * 4) // 5              # leave headroom for output/scratch
    bn = max(8, (budget // row_bytes) // 8 * 8)  # sublane multiple
    n_pad = ((n + 7) // 8) * 8
    bn = min(bn, n_pad)
    # Vocab-scale-C guard: if even the chosen tile exceeds the scoped limit,
    # raise the limit toward physical capacity (keeping DMA/scratch headroom).
    need = bn * row_bytes + (2 << 20)
    if need > vmem_limit:
        vmem_limit = min(max(cap - (8 << 20), vmem_limit), need)
    return bn, vmem_limit


def _nll_smooth_kernel(x_ref, t_ref, o_ref, *, confidence, smoothing, smooth_w,
                       n_total, block_n, needs_mask):
    """One grid step: (block_n, C) tile -> one partial loss sum."""
    i = pl.program_id(0)

    x = x_ref[...].astype(jnp.float32)            # (bn, C)  (torch .float())
    t = t_ref[...].astype(jnp.float32)            # (bn, C)

    # Numerically-stable log-sum-exp along the class (lane) axis.
    m = jnp.max(x, axis=-1, keepdims=True)        # (bn, 1)
    shifted = x - m                               # (bn, C)
    lse = jnp.log(jnp.sum(jnp.exp(shifted), axis=-1, keepdims=True))  # (bn, 1)

    # Row reductions (XLU) + per-row scalar combine:
    #   loss_row = confidence*nll + smoothing*smooth
    #            = lse*sum_w - (confidence*sum(t*shifted) + (smoothing/C)*sum(shifted))
    #   sum_w    = confidence*sum(t) + smoothing
    sum_t = jnp.sum(t, axis=-1, keepdims=True)                        # (bn, 1)
    sum_ts = jnp.sum(t * shifted, axis=-1, keepdims=True)             # (bn, 1)
    sum_s = jnp.sum(shifted, axis=-1, keepdims=True)                  # (bn, 1)
    sum_w = confidence * sum_t + smoothing                            # (bn, 1)
    loss = sum_w * lse - (confidence * sum_ts + smooth_w * sum_s)     # (bn, 1)

    def _write(vals):
        # One partial per block: value in element [0,0,0], zeros elsewhere, so
        # the host-side finalize is a dense *exact* sum over the partials.
        sub = jax.lax.broadcasted_iota(jnp.int32, (1, 8, 128), 1)
        lane = jax.lax.broadcasted_iota(jnp.int32, (1, 8, 128), 2)
        total = jnp.broadcast_to(jnp.sum(vals), (1, 8, 128))
        o_ref[...] = jnp.where((sub == 0) & (lane == 0), total,
                               0.0).astype(jnp.float32)

    if needs_mask:
        last = pl.num_programs(0) - 1

        @pl.when(i == last)
        def _():
            # Only the last block can contain padded rows; zero them before
            # the block-sum (select discards any NaN/Inf in padded rows).
            row = i * block_n + jax.lax.broadcasted_iota(
                jnp.int32, (block_n, 1), 0)
            _write(jnp.where(row < n_total, loss, 0.0))

        @pl.when(i != last)
        def _():
            _write(loss)
    else:
        _write(loss)


def nll_multilabel_smooth(x, target, smoothing=0.0, block_n=None):
    """Pallas implementation of NLLMultiLabelSmooth.forward (training mode).

    x:      (N, C) logits  -- any float dtype; bf16 halves the HBM bytes and
                              is cast to f32 in-kernel (matches torch .float()).
    target: (N, C) soft / multi-label targets (any float dtype).
    returns scalar f32 loss.
    """
    assert x.shape == target.shape and x.ndim == 2
    n, c = x.shape
    confidence = 1.0 - smoothing
    smooth_w = smoothing / c                     # folded constant (no /C in-kernel)

    planned_bn, vmem_limit = _plan_tiling(
        n, c, x.dtype.itemsize, target.dtype.itemsize)
    if block_n is None:
        block_n = planned_bn
    num_blocks = pl.cdiv(n, block_n)
    needs_mask = (n % block_n) != 0

    kernel = functools.partial(
        _nll_smooth_kernel,
        confidence=float(confidence),
        smoothing=float(smoothing),
        smooth_w=float(smooth_w),
        n_total=n,
        block_n=block_n,
        needs_mask=needs_mask,
    )

    bytes_in = n * c * (x.dtype.itemsize + target.dtype.itemsize)
    cost = pl.CostEstimate(
        flops=8 * n * c,
        transcendentals=n * c,
        bytes_accessed=int(bytes_in + num_blocks * 8 * 128 * 4),
    )

    partials = pl.pallas_call(
        kernel,
        out_shape=jax.ShapeDtypeStruct((num_blocks, 8, 128), jnp.float32),
        grid_spec=pltpu.PrefetchScalarGridSpec(
            num_scalar_prefetch=0,
            grid=(num_blocks,),
            in_specs=[
                pl.BlockSpec((block_n, c), lambda i: (i, 0)),
                pl.BlockSpec((block_n, c), lambda i: (i, 0)),
            ],
            out_specs=pl.BlockSpec((1, 8, 128), lambda i: (i, 0, 0)),
        ),
        compiler_params=pltpu.CompilerParams(
            dimension_semantics=("parallel",),     # independent per-block partials
            vmem_limit_bytes=int(vmem_limit),
        ),
        cost_estimate=cost,
    )(x, target)

    # Dense finalize: partials are exactly zero except one value per block.
    return jnp.sum(partials) * jnp.float32(1.0 / n)


def _reference(x, target, smoothing):
    """Pure-JAX reference matching the PyTorch forward (training mode)."""
    confidence = 1.0 - smoothing
    x = x.astype(jnp.float32)
    target = target.astype(jnp.float32)
    logprobs = jax.nn.log_softmax(x, axis=-1)
    nll_loss = jnp.sum(-logprobs * target, axis=-1)
    smooth_loss = -jnp.mean(logprobs, axis=-1)
    loss = confidence * nll_loss + smoothing * smooth_loss
    return jnp.mean(loss)


def _make_inputs(key, n, c, dtype):
    k_x, k_lam, k_a, k_b = jax.random.split(key, 4)
    x = jax.random.normal(k_x, (n, c), dtype=jnp.float32) * 2.0
    lam = jax.random.uniform(k_lam, (n, 1), dtype=jnp.float32)
    ia = jax.random.randint(k_a, (n,), 0, c)
    ib = jax.random.randint(k_b, (n,), 0, c)
    target = (lam * jax.nn.one_hot(ia, c, dtype=jnp.float32)
              + (1.0 - lam) * jax.nn.one_hot(ib, c, dtype=jnp.float32))
    return x.astype(dtype), target.astype(dtype)


if __name__ == "__main__":
    key = jax.random.PRNGKey(0)
    k1, k2, k3 = jax.random.split(key, 3)
    smoothing = 0.1

    # 1) single-block path (C=32 already exercises lane padding to 128).
    x, target = _make_inputs(k1, 16, 32, jnp.float32)
    loss = jax.block_until_ready(nll_multilabel_smooth(x, target, smoothing))
    ref = _reference(x, target, smoothing)
    assert jnp.allclose(loss, ref, rtol=1e-5, atol=1e-5), (loss, ref)

    # 2) multi-block "parallel partials" path: ragged last block + odd C
    #    (validates padded-lane masking in the reductions).
    x2, target2 = _make_inputs(k2, 20, 100, jnp.float32)
    loss2 = jax.block_until_ready(
        nll_multilabel_smooth(x2, target2, smoothing, block_n=8))
    ref2 = _reference(x2, target2, smoothing)
    assert jnp.allclose(loss2, ref2, rtol=1e-5, atol=1e-5), (loss2, ref2)

    # 3) bf16 inputs (half the HBM bytes; in-register upcast like torch .float()).
    x3, target3 = _make_inputs(k3, 24, 64, jnp.bfloat16)
    loss3 = jax.block_until_ready(nll_multilabel_smooth(x3, target3, smoothing))
    ref3 = _reference(x3, target3, smoothing)
    assert jnp.allclose(loss3, ref3, rtol=1e-4, atol=1e-4), (loss3, ref3)

    print("KERNEL_OK")
</pallas_src>

<mosaic_0001>
module attributes {stable_mosaic.version = 11 : i64} {
  func.func @_nll_smooth_kernel(%arg0: i32, %arg1: memref<16x32xf32, #tpu.memory_space<vmem>>, %arg2: memref<16x32xf32, #tpu.memory_space<vmem>>, %arg3: memref<1x8x128xf32, #tpu.memory_space<vmem>>) attributes {dimension_semantics = [#tpu.dimension_semantics<parallel>], iteration_bounds = array<i64: 1>, scalar_prefetch = 0 : i64, scratch_operands = 0 : i64, tpu.core_type = #tpu.core_type<tc>, window_params = [{transform_indices = @transform_0, window_bounds = array<i64: 16, 32>}, {transform_indices = @transform_1, window_bounds = array<i64: 16, 32>}, {transform_indices = @transform_2, window_bounds = array<i64: 1, 8, 128>}]} {
    %c0 = arith.constant 0 : index
    %c0_0 = arith.constant 0 : index
    %0 = vector.load %arg1[%c0, %c0_0] : memref<16x32xf32, #tpu.memory_space<vmem>>, vector<16x32xf32>
    %c0_1 = arith.constant 0 : index
    %c0_2 = arith.constant 0 : index
    %1 = vector.load %arg2[%c0_1, %c0_2] : memref<16x32xf32, #tpu.memory_space<vmem>>, vector<16x32xf32>
    %cst = arith.constant dense<0xFF800000> : vector<16xf32>
    %2 = vector.multi_reduction <maximumf>, %0, %cst [1] : vector<16x32xf32> to vector<16xf32>
    %3 = vector.shape_cast %2 : vector<16xf32> to vector<16x1xf32>
    %4 = vector.broadcast %3 : vector<16x1xf32> to vector<16x32xf32>
    %5 = arith.subf %0, %4 : vector<16x32xf32>
    %6 = math.exp %5 : vector<16x32xf32>
    %cst_3 = arith.constant dense<0.000000e+00> : vector<16xf32>
    %7 = vector.multi_reduction <add>, %6, %cst_3 [1] : vector<16x32xf32> to vector<16xf32>
    %8 = vector.shape_cast %7 : vector<16xf32> to vector<16x1xf32>
    %9 = math.log %8 : vector<16x1xf32>
    %cst_4 = arith.constant dense<0.000000e+00> : vector<16xf32>
    %10 = vector.multi_reduction <add>, %1, %cst_4 [1] : vector<16x32xf32> to vector<16xf32>
    %11 = vector.shape_cast %10 : vector<16xf32> to vector<16x1xf32>
    %12 = arith.mulf %1, %5 : vector<16x32xf32>
    %cst_5 = arith.constant dense<0.000000e+00> : vector<16xf32>
    %13 = vector.multi_reduction <add>, %12, %cst_5 [1] : vector<16x32xf32> to vector<16xf32>
    %14 = vector.shape_cast %13 : vector<16xf32> to vector<16x1xf32>
    %cst_6 = arith.constant dense<0.000000e+00> : vector<16xf32>
    %15 = vector.multi_reduction <add>, %5, %cst_6 [1] : vector<16x32xf32> to vector<16xf32>
    %16 = vector.shape_cast %15 : vector<16xf32> to vector<16x1xf32>
    %cst_7 = arith.constant 0.899999976 : f32
    %17 = vector.broadcast %cst_7 : f32 to vector<16x1xf32>
    %18 = arith.mulf %17, %11 : vector<16x1xf32>
    %cst_8 = arith.constant 1.000000e-01 : f32
    %19 = vector.broadcast %cst_8 : f32 to vector<16x1xf32>
    %20 = arith.addf %18, %19 : vector<16x1xf32>
    %21 = arith.mulf %20, %9 : vector<16x1xf32>
    %cst_9 = arith.constant 0.899999976 : f32
    %22 = vector.broadcast %cst_9 : f32 to vector<16x1xf32>
    %23 = arith.mulf %22, %14 : vector<16x1xf32>
    %cst_10 = arith.constant 3.125000e-03 : f32
    %24 = vector.broadcast %cst_10 : f32 to vector<16x1xf32>
    %25 = arith.mulf %24, %16 : vector<16x1xf32>
    %26 = arith.addf %23, %25 : vector<16x1xf32>
    %27 = arith.subf %21, %26 : vector<16x1xf32>
    %28 = tpu.iota {dimensions = array<i32: 1>} : vector<1x8x128xi32>
    %29 = tpu.iota {dimensions = array<i32: 2>} : vector<1x8x128xi32>
    %30 = vector.shape_cast %27 : vector<16x1xf32> to vector<1x16x1xf32>
    %cst_11 = arith.constant dense<0.000000e+00> : vector<1xf32>
    %31 = vector.multi_reduction <add>, %30, %cst_11 [1, 2] : vector<1x16x1xf32> to vector<1xf32>
    %32 = vector.shape_cast %31 : vector<1xf32> to vector<1x1x1xf32>
    %33 = vector.extract %32[0, 0, 0] : f32 from vector<1x1x1xf32>
    %34 = vector.broadcast %33 : f32 to vector<1x8x128xf32>
    %c0_i32 = arith.constant 0 : i32
    %35 = vector.broadcast %c0_i32 : i32 to vector<1x8x128xi32>
    %36 = arith.cmpi eq, %28, %35 : vector<1x8x128xi32>
    %c0_i32_12 = arith.constant 0 : i32
    %37 = vector.broadcast %c0_i32_12 : i32 to vector<1x8x128xi32>
    %38 = arith.cmpi eq, %29, %37 : vector<1x8x128xi32>
    %39 = arith.andi %36, %38 : vector<1x8x128xi1>
    %cst_13 = arith.constant 0.000000e+00 : f32
    %40 = vector.broadcast %cst_13 : f32 to vector<1x8x128xf32>
    %41 = arith.select %39, %34, %40 : vector<1x8x128xi1>, vector<1x8x128xf32>
    %c0_14 = arith.constant 0 : index
    %c0_15 = arith.constant 0 : index
    %c0_16 = arith.constant 0 : index
    %42 = vector.load %arg3[%c0_14, %c0_15, %c0_16] : memref<1x8x128xf32, #tpu.memory_space<vmem>>, vector<1x8x128xf32>
    tpu.vector_store %arg3[%c0_14, %c0_15, %c0_16], %41 {strides = array<i32>} : memref<1x8x128xf32, #tpu.memory_space<vmem>>, vector<1x8x128xf32>,
    return
  }
  func.func @transform_0(%arg0: i32) -> (i32, i32) {
    %c0_i32 = arith.constant 0 : i32
    %c0_i32_0 = arith.constant 0 : i32
    return %arg0, %c0_i32 : i32, i32
  }
  func.func @transform_1(%arg0: i32) -> (i32, i32) {
    %c0_i32 = arith.constant 0 : i32
    %c0_i32_0 = arith.constant 0 : i32
    return %arg0, %c0_i32 : i32, i32
  }
  func.func @transform_2(%arg0: i32) -> (i32, i32, i32) {
    %c0_i32 = arith.constant 0 : i32
    %c0_i32_0 = arith.constant 0 : i32
    %c0_i32_1 = arith.constant 0 : i32
    return %arg0, %c0_i32, %c0_i32_0 : i32, i32, i32
  }
}

</mosaic_0001>

<llo_original>
// kernel: tpu_custom_call.1
$region0: #{tpu_custom_call.1}
  #allocation0 [shape = 'u32[]', space=smem, size = 0x4, offset = 0x4, fixed_abs, tag = 'smem constant byte address 0x4 - core index']
  #allocation1 [shape = 'u32[144,128]{1,0:T(1,128)}', space=vmem, size = 0x12000, scoped, tag = 'internal scratch']
  %s0 = inlined_call_operand.hbm [shape: f32[16,32], index: 0, kind: input, shape index: {}]
  %s1 = inlined_call_operand.hbm [shape: f32[16,32], index: 1, kind: input, shape index: {}]
  %s2 = inlined_call_operand.hbm [shape: f32[1,8,128], index: 2, kind: output, shape index: {}]
  %s3 = sld [smem:[#allocation0]]
  $region26: #{tpu_custom_call.1} parent=0
    _
  %s5 = ssub.s32 1, %s3
  %s6 = scalar_select 0, %s5, %s3
  $region1: #{tpu_custom_call.1} parent=0
    #allocation2 [shape = 'u8[8192]{0}', space=vmem, size = 0x2000, scoped, tag = 'input window, operand 0, single buffered']
    #allocation3 [shape = 's32[1]{0}', space=sflag, size = 0x4, scoped, tag = 'scoped memory for tpu_custom_call.1']
    #allocation4 [shape = 's32[1]{0}', space=sflag, size = 0x4, scoped, tag = 'scoped memory for tpu_custom_call.1']
    #allocation5 [shape = 'u8[8192]{0}', space=vmem, size = 0x2000, scoped, tag = 'input window, operand 1, single buffered']
    #allocation6 [shape = 's32[1]{0}', space=sflag, size = 0x4, scoped, tag = 'scoped memory for tpu_custom_call.1']
    #allocation7 [shape = 'u8[4096]{0}', space=vmem, size = 0x1000, scoped, tag = 'output window, operand 0, single buffered']
    %7 = vsyncpa [#allocation3], 0
    %8 = vsyncpa [#allocation6], 0
    %9 = vsyncpa [#allocation4], 0
    // Predicated region
    $region2: #{tpu_custom_call.1} parent=1 // pred_check
      _
    $region3: #{tpu_custom_call.1} parent=1 // pred_check_branch
      %11 = sbr.rel (0) target = $region5
    $region4: #{tpu_custom_call.1} parent=1 // pred_region
      %s13 = ssub.s32 256, 256
      %14 = vsyncadd [#allocation3], %s13
      %s15 = sshll.u32 [#allocation2], 4
      %s16 = int_to_ptr.vmem [resolvable:$true] %s15
      %21 = dma.hbm_to_vmem [thread:$0]  %s0, 256, %s16, [#allocation3], 128, 128, 8
    $region5: #{tpu_custom_call.1} parent=1 // pred_fallthru
      _
    // Predicated region
    $region6: #{tpu_custom_call.1} parent=1 // pred_check
      _
    $region7: #{tpu_custom_call.1} parent=1 // pred_check_branch
      %23 = sbr.rel (0) target = $region9
    $region8: #{tpu_custom_call.1} parent=1 // pred_region
      %s25 = ssub.s32 256, 256
      %26 = vsyncadd [#allocation6], %s25
      %s27 = sshll.u32 [#allocation5], 4
      %s28 = int_to_ptr.vmem [resolvable:$true] %s27
      %33 = dma.hbm_to_vmem [thread:$0]  %s1, 256, %s28, [#allocation6], 128, 128, 8
    $region9: #{tpu_custom_call.1} parent=1 // pred_fallthru
      _
    // Predicated region
    $region10: #{tpu_custom_call.1} parent=1 // pred_check
      _
    $region11: #{tpu_custom_call.1} parent=1 // pred_check_branch
      %35 = sbr.rel (0) target = $region13
    $region12: #{tpu_custom_call.1} parent=1 // pred_region
      %36 = dma.done [#allocation3], 256
    $region13: #{tpu_custom_call.1} parent=1 // pred_fallthru
      _
    // Predicated region
    $region14: #{tpu_custom_call.1} parent=1 // pred_check
      _
    $region15: #{tpu_custom_call.1} parent=1 // pred_check_branch
      %38 = sbr.rel (0) target = $region17
    $region16: #{tpu_custom_call.1} parent=1 // pred_region
      %39 = dma.done [#allocation6], 256
    $region17: #{tpu_custom_call.1} parent=1 // pred_fallthru
      _
    %v40 = vld [vmem:[#allocation2] sm:$0xff]
    %v41 = vld [vmem:[#allocation2 + $0x8] sm:$0xff]
    %v42 = vld [vmem:[#allocation5] sm:$0xff]
    %v43 = vld [vmem:[#allocation5 + $0x8] sm:$0xff]
    %vm44 = vcmask 261120
    %v45 = vsel %vm44, %v40, -inf
    %46 = vmax.xlane.f32.xlu0 %v45
    %v47 = vpop.xlane.xlu0 %46
    %v48 = vsel %vm44, %v41, -inf
    %49 = vmax.xlane.f32.xlu0 %v48
    %v50 = vpop.xlane.xlu0 %49
    %v51 = vsub.f32 %v40, %v47
    %v52 = vsub.f32 %v41, %v50
    %v53 = vmul.f32 %v51, 1.442695
    %v54 = vpow.pop %v53
    %v55 = vmul.f32 %v52, 1.442695
    %v56 = vpow.pop %v55
    %v57 = vsel %vm44, %v54, 0.0
    %58 = vadd.xlane.f32.xlu0 %v57
    %v59 = vpop.xlane.xlu0 %58
    %v60 = vsel %vm44, %v56, 0.0
    %61 = vadd.xlane.f32.xlu0 %v60
    %v62 = vpop.xlane.xlu0 %61
    %v63 = vlog2.pop %v59
    %v64 = vmul.f32 %v63, 0.6931472
    %v65 = vlog2.pop %v62
    %v66 = vmul.f32 %v65, 0.6931472
    %v67 = vsel %vm44, %v42, 0.0
    %68 = vadd.xlane.f32.xlu0 %v67
    %v69 = vpop.xlane.xlu0 %68
    %v70 = vsel %vm44, %v43, 0.0
    %71 = vadd.xlane.f32.xlu0 %v70
    %v72 = vpop.xlane.xlu0 %71
    %v73 = vmul.f32 %v42, %v51
    %v74 = vmul.f32 %v43, %v52
    %v75 = vsel %vm44, %v73, 0.0
    %76 = vadd.xlane.f32.xlu0 %v75
    %v77 = vpop.xlane.xlu0 %76
    %v78 = vsel %vm44, %v74, 0.0
    %79 = vadd.xlane.f32.xlu0 %v78
    %v80 = vpop.xlane.xlu0 %79
    %v81 = vsel %vm44, %v51, 0.0
    %82 = vadd.xlane.f32.xlu0 %v81
    %v83 = vpop.xlane.xlu0 %82
    %v84 = vsel %vm44, %v52, 0.0
    %85 = vadd.xlane.f32.xlu0 %v84
    %v86 = vpop.xlane.xlu0 %85
    %v87 = vmul.f32 %v69, 0.9
    %v88 = vmul.f32 %v72, 0.9
    %v89 = vadd.f32 %v87, 0.1
    %v90 = vadd.f32 %v88, 0.1
    %v91 = vmul.f32 %v89, %v64
    %v92 = vmul.f32 %v90, %v66
    %v93 = vmul.f32 %v77, 0.9
    %v94 = vmul.f32 %v80, 0.9
    %v95 = vmul.f32 %v83, 0.003125
    %v96 = vmul.f32 %v86, 0.003125
    %v97 = vadd.f32 %v93, %v95
    %v98 = vadd.f32 %v94, %v96
    %v99 = vsub.f32 %v91, %v97
    %v100 = vsub.f32 %v92, %v98
    %v101 = vlaneseq
    %v102 = vshrl.u32 %v101, 7
    %v103 = vlaneseq
    %v104 = vand.u32 %v103, 127
    %vm105 = vcmask 7168
    %v106 = vsel %vm105, %v99, 0.0
    %v107 = vsel %vm105, %v100, 0.0
    %v108 = vadd.f32 %v106, %v107
    %109 = vadd.xlane.f32.xlu0 %v108
    %v110 = vpop.xlane.xlu0 %109
    %v111 = vrot.slane %v110, 4
    %v112 = vadd.f32 %v110, %v111
    %v113 = vrot.slane %v112, 2
    %v114 = vadd.f32 %v112, %v113
    %v115 = vrot.slane %v114, 1
    %v116 = vadd.f32 %v114, %v115
    %s117 = vtos %v116
    %v118 = vstv %s117
    %vm119 = vcmp.eq.s32.totalorder %v102, 0
    %vm120 = vcmp.eq.s32.totalorder %v104, 0
    %vm121 = vmand %vm119, %vm120
    %v122 = vsel %vm121, %v118, 0.0
    %123 = vst [vmem:[#allocation7] sm:$0xff] %v122
    // Predicated region
    $region18: #{tpu_custom_call.1} parent=1 // pred_check
      _
    $region19: #{tpu_custom_call.1} parent=1 // pred_check_branch
      %125 = sbr.rel (0) target = $region21
    $region20: #{tpu_custom_call.1} parent=1 // pred_region
      %s127 = ssub.s32 128, 128
      %128 = vsyncadd [#allocation4], %s127
      %s130 = sshll.u32 [#allocation7], 4
      %s131 = int_to_ptr.vmem [resolvable:$true] %s130
      %133 = dma.vmem_to_hbm [thread:$0]  %s131, 128, %s2, [#allocation4]
    $region21: #{tpu_custom_call.1} parent=1 // pred_fallthru
      _
    // Predicated region
    $region22: #{tpu_custom_call.1} parent=1 // pred_check
      _
    $region23: #{tpu_custom_call.1} parent=1 // pred_check_branch
      %135 = sbr.rel (0) target = $region25
    $region24: #{tpu_custom_call.1} parent=1 // pred_region
      %136 = dma.done [#allocation4], 128
    $region25: #{tpu_custom_call.1} parent=1 // pred_fallthru
      _
    %137 = vsyncpa [#allocation3], 1
    %138 = vsyncpa [#allocation6], 1
    %139 = vsyncpa [#allocation4], 1

</llo_original>
